<compile_context>
chip_gen: v5e
topology: v5e:2x2
jax: 0.10.0
libtpu: 0.0.40
codegen_flags: <defaults>
</compile_context>

<pallas_src>
import jax
import jax.numpy as jnp
from jax.experimental import pallas as pl
from jax.experimental.pallas import tpu as pltpu

# ---- model dims (match the PyTorch module defaults) -------------------------
IN_F, H1, H2, H3, OUT_F = 8, 20, 10, 5, 2

HPAD = 32      # hidden widths (20 / 10 / 5) padded to 32 lanes
OUT_PAD = 8    # output width (2) padded to 8 lanes
IN_PAD = 8     # W1 fan_in rows (IN_F == 8 already)

# ---- parameter-slab row layout (all offsets are multiples of 8) --------------
W1_OFF = 0                  # rows   0:8    [IN_PAD, HPAD]
W2_OFF = W1_OFF + IN_PAD    # rows   8:40   [HPAD,   HPAD]
W3_OFF = W2_OFF + HPAD      # rows  40:72   [HPAD,   HPAD]
W4_OFF = W3_OFF + HPAD      # rows  72:104  [HPAD,   HPAD] (only first OUT_F cols nonzero)
B_OFF = W4_OFF + HPAD       # rows 104:112  row l = bias of layer l+1 (zero-padded)
SLAB_ROWS = B_OFF + 8       # 112
SLAB_LANES = HPAD           # 32


def _round_up(n, m):
    return (n + m - 1) // m * m


def mlp_kernel(x_ref, p_ref, o_ref):
    x = x_ref[...]                                   # [TB, IN_F]

    w1 = p_ref[pl.ds(W1_OFF, IN_F), :]               # [8, 32]
    w2 = p_ref[pl.ds(W2_OFF, HPAD), :]               # [32, 32]
    w3 = p_ref[pl.ds(W3_OFF, HPAD), :]               # [32, 32]
    w4 = p_ref[pl.ds(W4_OFF, HPAD), :]               # [32, 32]
    biases = p_ref[pl.ds(B_OFF, 8), :]               # [8, 32]; rows 0..3 = b1..b4
    b1 = biases[0:1, :]
    b2 = biases[1:2, :]
    b3 = biases[2:3, :]
    b4 = biases[3:4, :OUT_PAD]                       # [1, 8]

    h = jnp.maximum(jnp.dot(x, w1, preferred_element_type=jnp.float32) + b1, 0.0)
    h = jnp.maximum(jnp.dot(h, w2, preferred_element_type=jnp.float32) + b2, 0.0)
    h = jnp.maximum(jnp.dot(h, w3, preferred_element_type=jnp.float32) + b3, 0.0)
    # Final layer contracts against the first OUT_PAD weight lanes -> [TB, 8] store.
    o_ref[...] = jnp.dot(h, w4[:, :OUT_PAD],
                         preferred_element_type=jnp.float32) + b4


def pack_params(params):
    """Pack ((W,b) x 4) into one zero-padded [SLAB_ROWS, SLAB_LANES] f32 slab."""
    slab = jnp.zeros((SLAB_ROWS, SLAB_LANES), jnp.float32)
    w_offs = (W1_OFF, W2_OFF, W3_OFF, W4_OFF)
    for li, ((w, b), w_off) in enumerate(zip(params, w_offs)):
        fi, fo = w.shape
        slab = slab.at[w_off:w_off + fi, :fo].set(w.astype(jnp.float32))
        slab = slab.at[B_OFF + li, :fo].set(b.reshape(-1).astype(jnp.float32))
    return slab


def _choose_tile(batch, tb):
    """Batch tile: multiple of 8, as large as requested, but keep >= 2 grid
    steps when the batch allows it (v7x megacore sharding)."""
    bp8 = _round_up(max(batch, 1), 8)
    tile = min(_round_up(tb, 8), bp8)
    if bp8 >= 16:
        half = _round_up((bp8 + 1) // 2, 8)
        tile = min(tile, half)
    return max(tile, 8)


def ann_forward(x, slab, *, tb=1024):
    """x: [B, IN_F] f32, slab: pre-packed parameter slab -> [B, OUT_F] f32."""
    B, F = x.shape
    assert F == IN_F
    TB = _choose_tile(B, tb)
    Bp = _round_up(B, TB)
    if Bp != B:
        x = jnp.pad(x, ((0, Bp - B), (0, 0)))

    out = pl.pallas_call(
        mlp_kernel,
        out_shape=jax.ShapeDtypeStruct((Bp, OUT_PAD), jnp.float32),
        grid=(Bp // TB,),
        in_specs=[
            pl.BlockSpec((TB, IN_F), lambda i: (i, 0)),              # x tile (pipelined)
            pl.BlockSpec((SLAB_ROWS, SLAB_LANES), lambda i: (0, 0)),  # params: VMEM-resident
        ],
        out_specs=pl.BlockSpec((TB, OUT_PAD), lambda i: (i, 0)),      # narrow output slab
        compiler_params=pltpu.CompilerParams(
            dimension_semantics=("parallel",)),
    )(x, slab)
    return out[:B, :OUT_F]


def init_params(key, input_features=IN_F, hidden1=H1, hidden2=H2,
                hidden3=H3, out_features=OUT_F):
    """nn.Linear-style init; weights stored transposed as [fan_in, fan_out]."""
    dims = [(input_features, hidden1), (hidden1, hidden2),
            (hidden2, hidden3), (hidden3, out_features)]
    params = []
    for fan_in, fan_out in dims:
        key, kw, kb = jax.random.split(key, 3)
        bound = 1.0 / jnp.sqrt(fan_in)
        w = jax.random.uniform(kw, (fan_in, fan_out), jnp.float32, -bound, bound)
        b = jax.random.uniform(kb, (fan_out,), jnp.float32, -bound, bound)
        params.append((w, b))
    return params


def ann_reference(x, params):
    h = x
    for i, (w, b) in enumerate(params):
        h = h @ w + b
        if i < len(params) - 1:
            h = jnp.maximum(h, 0.0)
    return h


if __name__ == "__main__":
    key = jax.random.PRNGKey(0)
    kx, kp = jax.random.split(key)

    params = init_params(kp)
    slab = pack_params(params)

    # Batched case: exercises the batch grid (2 tiles, megacore-shardable).
    batch = 256
    x = jax.random.normal(kx, (batch, IN_F), jnp.float32)
    out = jax.block_until_ready(ann_forward(x, slab))
    ref = ann_reference(x, params)
    assert out.shape == (batch, OUT_F), out.shape
    assert jnp.allclose(out, ref, atol=1e-5, rtol=1e-5), "batched mismatch vs reference"

    # Ragged case: batch not a multiple of 8 -> exercises the zero-pad path.
    x2 = jax.random.normal(kx, (13, IN_F), jnp.float32)
    out2 = jax.block_until_ready(ann_forward(x2, slab))
    ref2 = ann_reference(x2, params)
    assert out2.shape == (13, OUT_F), out2.shape
    assert jnp.allclose(out2, ref2, atol=1e-5, rtol=1e-5), "ragged mismatch vs reference"

    print("KERNEL_OK")
</pallas_src>

<mosaic_0001>
module attributes {stable_mosaic.version = 11 : i64} {
  func.func @mlp_kernel(%arg0: i32, %arg1: memref<128x8xf32, #tpu.memory_space<vmem>>, %arg2: memref<112x32xf32, #tpu.memory_space<vmem>>, %arg3: memref<128x8xf32, #tpu.memory_space<vmem>>) attributes {dimension_semantics = [#tpu.dimension_semantics<parallel>], iteration_bounds = array<i64: 2>, scalar_prefetch = 0 : i64, scratch_operands = 0 : i64, tpu.core_type = #tpu.core_type<tc>, window_params = [{transform_indices = @transform_0, window_bounds = array<i64: 128, 8>}, {pipeline_mode = #tpu.pipeline_mode<synchronous>, transform_indices = @transform_1, window_bounds = array<i64: 112, 32>}, {transform_indices = @transform_2, window_bounds = array<i64: 128, 8>}]} {
    %c0 = arith.constant 0 : index
    %c0_0 = arith.constant 0 : index
    %0 = vector.load %arg1[%c0, %c0_0] : memref<128x8xf32, #tpu.memory_space<vmem>>, vector<128x8xf32>
    %c0_1 = arith.constant 0 : index
    %c0_2 = arith.constant 0 : index
    %1 = vector.load %arg2[%c0_1, %c0_2] : memref<112x32xf32, #tpu.memory_space<vmem>>, vector<8x32xf32>
    %c8 = arith.constant 8 : index
    %c0_3 = arith.constant 0 : index
    %2 = vector.load %arg2[%c8, %c0_3] : memref<112x32xf32, #tpu.memory_space<vmem>>, vector<32x32xf32>
    %c40 = arith.constant 40 : index
    %c0_4 = arith.constant 0 : index
    %3 = vector.load %arg2[%c40, %c0_4] : memref<112x32xf32, #tpu.memory_space<vmem>>, vector<32x32xf32>
    %c72 = arith.constant 72 : index
    %c0_5 = arith.constant 0 : index
    %4 = vector.load %arg2[%c72, %c0_5] : memref<112x32xf32, #tpu.memory_space<vmem>>, vector<32x32xf32>
    %c104 = arith.constant 104 : index
    %c0_6 = arith.constant 0 : index
    %5 = vector.load %arg2[%c104, %c0_6] : memref<112x32xf32, #tpu.memory_space<vmem>>, vector<8x32xf32>
    %6 = vector.extract_strided_slice %5 {offsets = [0, 0], sizes = [1, 32], strides = [1, 1]} : vector<8x32xf32> to vector<1x32xf32>
    %7 = vector.extract_strided_slice %5 {offsets = [1, 0], sizes = [1, 32], strides = [1, 1]} : vector<8x32xf32> to vector<1x32xf32>
    %8 = vector.extract_strided_slice %5 {offsets = [2, 0], sizes = [1, 32], strides = [1, 1]} : vector<8x32xf32> to vector<1x32xf32>
    %9 = vector.extract_strided_slice %5 {offsets = [3, 0], sizes = [1, 8], strides = [1, 1]} : vector<8x32xf32> to vector<1x8xf32>
    %cst = arith.constant dense<0.000000e+00> : vector<128x32xf32>
    %10 = tpu.matmul %0, %1, %cst {dimension_numbers = #tpu.dot_dimension_numbers<[1], [0], [0], [1], [0, 0, 1, 1], [], []>} : vector<128x8xf32>, vector<8x32xf32>, vector<128x32xf32> -> vector<128x32xf32>
    %11 = vector.broadcast %6 : vector<1x32xf32> to vector<128x32xf32>
    %12 = arith.addf %10, %11 : vector<128x32xf32>
    %cst_7 = arith.constant 0.000000e+00 : f32
    %13 = vector.broadcast %cst_7 : f32 to vector<128x32xf32>
    %14 = arith.maximumf %12, %13 : vector<128x32xf32>
    %cst_8 = arith.constant dense<0.000000e+00> : vector<128x32xf32>
    %15 = tpu.matmul %14, %2, %cst_8 {dimension_numbers = #tpu.dot_dimension_numbers<[1], [0], [0], [1], [0, 0, 1, 1], [], []>} : vector<128x32xf32>, vector<32x32xf32>, vector<128x32xf32> -> vector<128x32xf32>
    %16 = vector.broadcast %7 : vector<1x32xf32> to vector<128x32xf32>
    %17 = arith.addf %15, %16 : vector<128x32xf32>
    %cst_9 = arith.constant 0.000000e+00 : f32
    %18 = vector.broadcast %cst_9 : f32 to vector<128x32xf32>
    %19 = arith.maximumf %17, %18 : vector<128x32xf32>
    %cst_10 = arith.constant dense<0.000000e+00> : vector<128x32xf32>
    %20 = tpu.matmul %19, %3, %cst_10 {dimension_numbers = #tpu.dot_dimension_numbers<[1], [0], [0], [1], [0, 0, 1, 1], [], []>} : vector<128x32xf32>, vector<32x32xf32>, vector<128x32xf32> -> vector<128x32xf32>
    %21 = vector.broadcast %8 : vector<1x32xf32> to vector<128x32xf32>
    %22 = arith.addf %20, %21 : vector<128x32xf32>
    %cst_11 = arith.constant 0.000000e+00 : f32
    %23 = vector.broadcast %cst_11 : f32 to vector<128x32xf32>
    %24 = arith.maximumf %22, %23 : vector<128x32xf32>
    %25 = vector.extract_strided_slice %4 {offsets = [0, 0], sizes = [32, 8], strides = [1, 1]} : vector<32x32xf32> to vector<32x8xf32>
    %cst_12 = arith.constant dense<0.000000e+00> : vector<128x8xf32>
    %26 = tpu.matmul %24, %25, %cst_12 {dimension_numbers = #tpu.dot_dimension_numbers<[1], [0], [0], [1], [0, 0, 1, 1], [], []>} : vector<128x32xf32>, vector<32x8xf32>, vector<128x8xf32> -> vector<128x8xf32>
    %27 = vector.broadcast %9 : vector<1x8xf32> to vector<128x8xf32>
    %28 = arith.addf %26, %27 : vector<128x8xf32>
    %c0_13 = arith.constant 0 : index
    %c0_14 = arith.constant 0 : index
    %29 = vector.load %arg3[%c0_13, %c0_14] : memref<128x8xf32, #tpu.memory_space<vmem>>, vector<128x8xf32>
    tpu.vector_store %arg3[%c0_13, %c0_14], %28 {strides = array<i32>} : memref<128x8xf32, #tpu.memory_space<vmem>>, vector<128x8xf32>,
    return
  }
  func.func @transform_0(%arg0: i32) -> (i32, i32) {
    %c0_i32 = arith.constant 0 : i32
    %c0_i32_0 = arith.constant 0 : i32
    return %arg0, %c0_i32 : i32, i32
  }
  func.func @transform_1(%arg0: i32) -> (i32, i32) {
    %c0_i32 = arith.constant 0 : i32
    %c0_i32_0 = arith.constant 0 : i32
    %c0_i32_1 = arith.constant 0 : i32
    return %c0_i32, %c0_i32_0 : i32, i32
  }
  func.func @transform_2(%arg0: i32) -> (i32, i32) {
    %c0_i32 = arith.constant 0 : i32
    %c0_i32_0 = arith.constant 0 : i32
    return %arg0, %c0_i32 : i32, i32
  }
}

</mosaic_0001>

<llo_original>
// kernel: tpu_custom_call.1
$region0: #{tpu_custom_call.1}
  #allocation0 [shape = 'u32[]', space=smem, size = 0x4, offset = 0x4, fixed_abs, tag = 'smem constant byte address 0x4 - core index']
  #allocation1 [shape = 'u32[72,128]{1,0:T(1,128)}', space=vmem, size = 0x9000, scoped, tag = 'internal scratch']
  %s0 = inlined_call_operand.vmem [shape: f32[256,8], index: 0, kind: input, shape index: {}]
  %s1 = inlined_call_operand.vmem [shape: f32[112,32], index: 1, kind: input, shape index: {}]
  %s2 = inlined_call_operand.vmem [shape: f32[256,8], index: 2, kind: output, shape index: {}]
  %s3 = sld [smem:[#allocation0]]
  $region41: #{tpu_custom_call.1} parent=0
    _
  %s5 = ssub.s32 1, %s3
  %s6 = scalar_select 0, %s5, %s3
  loop: start=0, step=1, limit=4
  $region2: #{tpu_custom_call.1} parent=0 // loop_pre_header
    _
  $region3: #{tpu_custom_call.1} parent=0 // loop_header
    %s8 = sphi 0, %s12
    %p9 = scmp.ge.s32.totalorder %s8, 4
    %s18 = sphi 0, %s20
    %s21 = sphi 0, %s18
    %s22 = sphi 0, %s21
    %s38 = sphi 0, %s22
    %s42 = sphi 0, %s42
    %s44 = sphi 0, %s42
    %s45 = sphi 0, %s44
    %s59 = sphi 0, %s45
    %s65 = sphi 0, %s67
    %s68 = sphi 0, %s65
    %s69 = sphi 0, %s68
    %s85 = sphi 0, %s69
  $region4: #{tpu_custom_call.1} parent=0 // loop_header_branch
    %11 = sbr.rel (%p9) target = $region8
  $region5: #{tpu_custom_call.1} parent=0 // loop_body
    %s13 = ssub.s32 %s8, 1
    %s14 = ssub.s32 %s8, 2
    %s15 = sadd.s32 %s8, 1
    %s16 = ssub.s32 %s8, %s15
    %p17 = scmp.eq.s32.totalorder %s16, 0
    %s19 = sadd.s32 %s18, 1
    %s20 = scalar_select %p17, %s18, %s19
    %p23 = pneg %p17
    %p24 = scmp.eq.s32.totalorder %s8, 1
    %p25 = por %p23, %p24
    %p26 = scmp.ne.s32.totalorder %s18, %s21
    %p27 = scmp.eq.s32.totalorder %s8, 0
    %p28 = por %p26, %p27
    %p29 = scmp.ne.s32.totalorder %s18, %s21
    %p30 = scmp.eq.s32.totalorder %s13, 1
    %p31 = por %p29, %p30
    %p32 = scmp.ne.s32.totalorder %s21, %s22
    %p33 = scmp.eq.s32.totalorder %s13, 0
    %p34 = por %p32, %p33
    %p35 = scmp.ne.s32.totalorder %s21, %s22
    %p36 = scmp.eq.s32.totalorder %s14, 1
    %p37 = por %p35, %p36
    %p39 = scmp.ne.s32.totalorder %s22, %s38
    %p40 = scmp.eq.s32.totalorder %s14, 0
    %p41 = por %p39, %p40
    %s43 = sadd.s32 %s42, 1
    %p46 = scmp.eq.s32.totalorder %s8, 1
    %p47 = scmp.ne.s32.totalorder %s42, %s44
    %p48 = scmp.eq.s32.totalorder %s8, 0
    %p49 = por %p47, %p48
    %p50 = scmp.ne.s32.totalorder %s42, %s44
    %p51 = scmp.eq.s32.totalorder %s13, 1
    %p52 = por %p50, %p51
    %p53 = scmp.ne.s32.totalorder %s44, %s45
    %p54 = scmp.eq.s32.totalorder %s13, 0
    %p55 = por %p53, %p54
    %p56 = scmp.ne.s32.totalorder %s44, %s45
    %p57 = scmp.eq.s32.totalorder %s14, 1
    %p58 = por %p56, %p57
    %p60 = scmp.ne.s32.totalorder %s45, %s59
    %p61 = scmp.eq.s32.totalorder %s14, 0
    %p62 = por %p60, %p61
    %s63 = ssub.s32 %s8, %s15
    %p64 = scmp.eq.s32.totalorder %s63, 0
    %s66 = sadd.s32 %s65, 1
    %s67 = scalar_select %p64, %s65, %s66
    %p70 = pneg %p64
    %p71 = scmp.eq.s32.totalorder %s8, 1
    %p72 = por %p70, %p71
    %p73 = scmp.ne.s32.totalorder %s65, %s68
    %p74 = scmp.eq.s32.totalorder %s8, 0
    %p75 = por %p73, %p74
    %p76 = scmp.ne.s32.totalorder %s65, %s68
    %p77 = scmp.eq.s32.totalorder %s13, 1
    %p78 = por %p76, %p77
    %p79 = scmp.ne.s32.totalorder %s68, %s69
    %p80 = scmp.eq.s32.totalorder %s13, 0
    %p81 = por %p79, %p80
    %p82 = scmp.ne.s32.totalorder %s68, %s69
    %p83 = scmp.eq.s32.totalorder %s14, 1
    %p84 = por %p82, %p83
    %p86 = scmp.ne.s32.totalorder %s69, %s85
    %p87 = scmp.eq.s32.totalorder %s14, 0
    %p88 = por %p86, %p87
    %p89 = scmp.le.s32.totalorder 1, %s8
    %p90 = scmp.lt.s32.totalorder %s8, 3
    %p91 = pnand %p89, %p90
    %p92 = pneg %p91
    // Predicated region
    $region9: #{tpu_custom_call.1} parent=5 // pred_check
      _
    $region10: #{tpu_custom_call.1} parent=5 // pred_check_branch
      %94 = sbr.rel (%p91) target = $region12
    $region11: #{tpu_custom_call.1} parent=5 // pred_region
      %s95 = ssub.s32 %s8, 1
      // Predicated region
      $region13: #{tpu_custom_call.1} parent=11 // pred_check
        %p96 = pneg %p55
      $region14: #{tpu_custom_call.1} parent=11 // pred_check_branch
        %98 = sbr.rel (%p96) target = $region16
      $region15: #{tpu_custom_call.1} parent=11 // pred_region
        _
      $region16: #{tpu_custom_call.1} parent=11 // pred_fallthru
        _
    $region12: #{tpu_custom_call.1} parent=5 // pred_fallthru
      _
    %p99 = scmp.lt.s32.totalorder %s8, 2
    // Predicated region
    $region17: #{tpu_custom_call.1} parent=5 // pred_check
      %p100 = pneg %p99
    $region18: #{tpu_custom_call.1} parent=5 // pred_check_branch
      %102 = sbr.rel (%p100) target = $region20
    $region19: #{tpu_custom_call.1} parent=5 // pred_region
      // Predicated region
      $region21: #{tpu_custom_call.1} parent=19 // pred_check
        %p103 = pneg %p28
      $region22: #{tpu_custom_call.1} parent=19 // pred_check_branch
        %105 = sbr.rel (%p103) target = $region24
      $region23: #{tpu_custom_call.1} parent=19 // pred_region
        %s106 = smul.u32 16, %s8
        %p107 = scmp.lt.s32.totalorder %s106, 31
        %s108 = scalar_select %p107, %s106, 31
        %s109 = smul.addr %s108, 8
        %s110 = scalar_lea.vmem %s0, %s109
        %s111 = smul.u32 16, %s8
      $region24: #{tpu_custom_call.1} parent=19 // pred_fallthru
        _
    $region20: #{tpu_custom_call.1} parent=5 // pred_fallthru
      _
    %p112 = scmp.le.s32.totalorder 1, %s8
    %p113 = scmp.lt.s32.totalorder %s8, 3
    %p114 = pnand %p112, %p113
    %p115 = pneg %p114
    // Predicated region
    $region25: #{tpu_custom_call.1} parent=5 // pred_check
      _
    $region26: #{tpu_custom_call.1} parent=5 // pred_check_branch
      %117 = sbr.rel (%p114) target = $region28
    $region27: #{tpu_custom_call.1} parent=5 // pred_region
      %s118 = ssub.s32 %s8, 1
      %s119 = smul.u32 16, %s13
      %p120 = scmp.lt.s32.totalorder %s119, 31
      %s121 = scalar_select %p120, %s119, 31
      %s122 = smul.addr %s121, 8
      %s123 = scalar_lea.vmem %s0, %s122
      %p124 = pneg %p34
      %p125 = pneg %p31
      %p126 = pneg %p55
      %p127 = pneg %p52
      %p128 = pneg %p81
      %p129 = pneg %p78
      %s130 = smul.u32 16, %s13
      %p131 = scmp.lt.s32.totalorder %s130, 31
      %s132 = scalar_select %p131, %s130, 31
      %s133 = smul.addr %s132, 8
      %s134 = scalar_lea.vmem %s2, %s133
      %s135 = smul.u32 16, %s13
      %p136 = scmp.lt.s32.totalorder %s135, 31
      %s137 = scalar_select %p136, %s135, 31
      %s138 = smul.addr %s137, 8
      %s139 = scalar_lea.vmem %s0, %s138
      %s140 = smul.u32 16, %s13
      %s141 = smul.u32 16, %s13
      %p142 = scmp.lt.s32.totalorder %s141, 31
      %s143 = scalar_select %p142, %s141, 31
      %s144 = smul.addr %s143, 8
      %s145 = scalar_lea.vmem %s2, %s144
      %s146 = smul.u32 16, %s13
      %v147 = vld [vmem:[%s139] sm:$0xff]
      %v148 = vld [vmem:[%s139 + $0x8] sm:$0xff]
      %v149 = vld [vmem:[%s139 + $0x10] sm:$0xff]
      %v150 = vld [vmem:[%s139 + $0x18] sm:$0xff]
      %v151 = vld [vmem:[%s139 + $0x20] sm:$0xff]
      %v152 = vld [vmem:[%s139 + $0x28] sm:$0xff]
      %v153 = vld [vmem:[%s139 + $0x30] sm:$0xff]
      %v154 = vld [vmem:[%s139 + $0x38] sm:$0xff]
      %v155 = vld [vmem:[%s139 + $0x40] sm:$0xff]
      %v156 = vld [vmem:[%s139 + $0x48] sm:$0xff]
      %v157 = vld [vmem:[%s139 + $0x50] sm:$0xff]
      %v158 = vld [vmem:[%s139 + $0x58] sm:$0xff]
      %v159 = vld [vmem:[%s139 + $0x60] sm:$0xff]
      %v160 = vld [vmem:[%s139 + $0x68] sm:$0xff]
      %v161 = vld [vmem:[%s139 + $0x70] sm:$0xff]
      %v162 = vld [vmem:[%s139 + $0x78] sm:$0xff]
      %v163 = vld [vmem:[%s1] sm:$0xff]
      %v164 = vld [vmem:[%s1 + $0x8] sm:$0xff]
      %v165 = vld [vmem:[%s1 + $0x10] sm:$0xff]
      %v166 = vld [vmem:[%s1 + $0x18] sm:$0xff]
      %v167 = vld [vmem:[%s1 + $0x20] sm:$0xff]
      %v168 = vld [vmem:[%s1 + $0x28] sm:$0xff]
      %v169 = vld [vmem:[%s1 + $0x30] sm:$0xff]
      %v170 = vld [vmem:[%s1 + $0x38] sm:$0xff]
      %v171 = vld [vmem:[%s1 + $0x40] sm:$0xff]
      %v172 = vld [vmem:[%s1 + $0x48] sm:$0xff]
      %v173 = vld [vmem:[%s1 + $0x50] sm:$0xff]
      %v174 = vld [vmem:[%s1 + $0x58] sm:$0xff]
      %v175 = vld [vmem:[%s1 + $0x60] sm:$0xff]
      %v176 = vld [vmem:[%s1 + $0x68] sm:$0xff]
      %v177 = vperm.slane %v176, 0
      %vm178 = vcmask 64512
      %v180 = vsel %vm178, %v147, 0
      %v183 = vsel %vm178, %v148, 0
      %v186 = vsel %vm178, %v149, 0
      %v189 = vsel %vm178, %v150, 0
      %v192 = vsel %vm178, %v151, 0
      %v195 = vsel %vm178, %v152, 0
      %v198 = vsel %vm178, %v153, 0
      %v201 = vsel %vm178, %v154, 0
      %v204 = vsel %vm178, %v155, 0
      %v207 = vsel %vm178, %v156, 0
      %v210 = vsel %vm178, %v157, 0
      %v213 = vsel %vm178, %v158, 0
      %v216 = vsel %vm178, %v159, 0
      %v219 = vsel %vm178, %v160, 0
      %v222 = vsel %vm178, %v161, 0
      %v225 = vsel %vm178, %v162, 0
      %227 = vmatpush.msra.mxu0 0.0
      %228 = vmatpush.msra.mxu0 0.0
      %229 = vmatpush.msra.mxu0 0.0
      %230 = vmatpush.msra.mxu0 0.0
      %231 = vmatpush.msra.mxu0 0.0
      %232 = vmatpush.msra.mxu0 0.0
      %233 = vmatpush.msra.mxu0 0.0
      %234 = vmatpush.msra.mxu0 0.0
      %235 = vmatpush.msra.mxu0 0.0
      %236 = vmatpush.msra.mxu0 0.0
      %237 = vmatpush.msra.mxu0 0.0
      %238 = vmatpush.msra.mxu0 0.0
      %239 = vmatpush.msra.mxu0 0.0
      %240 = vmatpush.msra.mxu0 0.0
      %241 = vmatpush.msra.mxu0 0.0
      %242 = vmatpush.msra.mxu0 %v163
      %243 = vmatmul.f32.gmra.mxu0 %v180
      %v244 = vpop.f32.mrf.mxu0
      %v245 = vadd.f32 %v177, %v244
      %246 = vmatmul.f32.gmra.mxu0 %v183
      %v247 = vpop.f32.mrf.mxu0
      %v248 = vadd.f32 %v177, %v247
      %249 = vmatmul.f32.gmra.mxu0 %v186
      %v250 = vpop.f32.mrf.mxu0
      %v251 = vadd.f32 %v177, %v250
      %252 = vmatmul.f32.gmra.mxu0 %v189
      %v253 = vpop.f32.mrf.mxu0
      %v254 = vadd.f32 %v177, %v253
      %255 = vmatmul.f32.gmra.mxu0 %v192
      %v256 = vpop.f32.mrf.mxu0
      %v257 = vadd.f32 %v177, %v256
      %258 = vmatmul.f32.gmra.mxu0 %v195
      %v259 = vpop.f32.mrf.mxu0
      %v260 = vadd.f32 %v177, %v259
      %261 = vmatmul.f32.gmra.mxu0 %v198
      %v262 = vpop.f32.mrf.mxu0
      %v263 = vadd.f32 %v177, %v262
      %264 = vmatmul.f32.gmra.mxu0 %v201
      %v265 = vpop.f32.mrf.mxu0
      %v266 = vadd.f32 %v177, %v265
      %267 = vmatmul.f32.gmra.mxu0 %v204
      %v268 = vpop.f32.mrf.mxu0
      %v269 = vadd.f32 %v177, %v268
      %270 = vmatmul.f32.gmra.mxu0 %v207
      %v271 = vpop.f32.mrf.mxu0
      %v272 = vadd.f32 %v177, %v271
      %273 = vmatmul.f32.gmra.mxu0 %v210
      %v274 = vpop.f32.mrf.mxu0
      %v275 = vadd.f32 %v177, %v274
      %276 = vmatmul.f32.gmra.mxu0 %v213
      %v277 = vpop.f32.mrf.mxu0
      %v278 = vadd.f32 %v177, %v277
      %279 = vmatmul.f32.gmra.mxu0 %v216
      %v280 = vpop.f32.mrf.mxu0
      %v281 = vadd.f32 %v177, %v280
      %282 = vmatmul.f32.gmra.mxu0 %v219
      %v283 = vpop.f32.mrf.mxu0
      %v284 = vadd.f32 %v177, %v283
      %285 = vmatmul.f32.gmra.mxu0 %v222
      %v286 = vpop.f32.mrf.mxu0
      %v287 = vadd.f32 %v177, %v286
      %288 = vmatmul.f32.gmra.mxu0 %v225
      %v289 = vpop.f32.mrf.mxu0
      %v290 = vadd.f32 %v177, %v289
      %291 = vdwg.mxu0
      %v292 = vmax.f32 %v245, 0.0
      %v293 = vmax.f32 %v248, 0.0
      %v294 = vmax.f32 %v251, 0.0
      %v295 = vmax.f32 %v254, 0.0
      %v296 = vmax.f32 %v257, 0.0
      %v297 = vmax.f32 %v260, 0.0
      %v298 = vmax.f32 %v263, 0.0
      %v299 = vmax.f32 %v266, 0.0
      %v300 = vmax.f32 %v269, 0.0
      %v301 = vmax.f32 %v272, 0.0
      %v302 = vmax.f32 %v275, 0.0
      %v303 = vmax.f32 %v278, 0.0
      %v304 = vmax.f32 %v281, 0.0
      %v305 = vmax.f32 %v284, 0.0
      %v306 = vmax.f32 %v287, 0.0
      %v307 = vmax.f32 %v290, 0.0
      %v308 = vperm.slane %v176, 1
      %vm309 = vcmask 261120
      %v311 = vsel %vm309, %v292, 0
      %v314 = vsel %vm309, %v293, 0
      %v317 = vsel %vm309, %v294, 0
      %v320 = vsel %vm309, %v295, 0
      %v323 = vsel %vm309, %v296, 0
      %v326 = vsel %vm309, %v297, 0
      %v329 = vsel %vm309, %v298, 0
      %v332 = vsel %vm309, %v299, 0
      %v335 = vsel %vm309, %v300, 0
      %v338 = vsel %vm309, %v301, 0
      %v341 = vsel %vm309, %v302, 0
      %v344 = vsel %vm309, %v303, 0
      %v347 = vsel %vm309, %v304, 0
      %v350 = vsel %vm309, %v305, 0
      %v353 = vsel %vm309, %v306, 0
      %v356 = vsel %vm309, %v307, 0
      %358 = vmatpush.msra.mxu0 0.0
      %359 = vmatpush.msra.mxu0 0.0
      %360 = vmatpush.msra.mxu0 0.0
      %361 = vmatpush.msra.mxu0 0.0
      %362 = vmatpush.msra.mxu0 0.0
      %363 = vmatpush.msra.mxu0 0.0
      %364 = vmatpush.msra.mxu0 0.0
      %365 = vmatpush.msra.mxu0 0.0
      %366 = vmatpush.msra.mxu0 0.0
      %367 = vmatpush.msra.mxu0 0.0
      %368 = vmatpush.msra.mxu0 0.0
      %369 = vmatpush.msra.mxu0 0.0
      %370 = vmatpush.msra.mxu0 %v167
      %371 = vmatpush.msra.mxu0 %v166
      %372 = vmatpush.msra.mxu0 %v165
      %373 = vmatpush.msra.mxu0 %v164
      %374 = vmatmul.f32.gmra.mxu0 %v311
      %v375 = vpop.f32.mrf.mxu0
      %v376 = vadd.f32 %v308, %v375
      %377 = vmatmul.f32.gmra.mxu0 %v314
      %v378 = vpop.f32.mrf.mxu0
      %v379 = vadd.f32 %v308, %v378
      %380 = vmatmul.f32.gmra.mxu0 %v317
      %v381 = vpop.f32.mrf.mxu0
      %v382 = vadd.f32 %v308, %v381
      %383 = vmatmul.f32.gmra.mxu0 %v320
      %v384 = vpop.f32.mrf.mxu0
      %v385 = vadd.f32 %v308, %v384
      %386 = vmatmul.f32.gmra.mxu0 %v323
      %v387 = vpop.f32.mrf.mxu0
      %v388 = vadd.f32 %v308, %v387
      %389 = vmatmul.f32.gmra.mxu0 %v326
      %v390 = vpop.f32.mrf.mxu0
      %v391 = vadd.f32 %v308, %v390
      %392 = vmatmul.f32.gmra.mxu0 %v329
      %v393 = vpop.f32.mrf.mxu0
      %v394 = vadd.f32 %v308, %v393
      %395 = vmatmul.f32.gmra.mxu0 %v332
      %v396 = vpop.f32.mrf.mxu0
      %v397 = vadd.f32 %v308, %v396
      %398 = vmatmul.f32.gmra.mxu0 %v335
      %v399 = vpop.f32.mrf.mxu0
      %v400 = vadd.f32 %v308, %v399
      %401 = vmatmul.f32.gmra.mxu0 %v338
      %v402 = vpop.f32.mrf.mxu0
      %v403 = vadd.f32 %v308, %v402
      %404 = vmatmul.f32.gmra.mxu0 %v341
      %v405 = vpop.f32.mrf.mxu0
      %v406 = vadd.f32 %v308, %v405
      %407 = vmatmul.f32.gmra.mxu0 %v344
      %v408 = vpop.f32.mrf.mxu0
      %v409 = vadd.f32 %v308, %v408
      %410 = vmatmul.f32.gmra.mxu0 %v347
      %v411 = vpop.f32.mrf.mxu0
      %v412 = vadd.f32 %v308, %v411
      %413 = vmatmul.f32.gmra.mxu0 %v350
      %v414 = vpop.f32.mrf.mxu0
      %v415 = vadd.f32 %v308, %v414
      %416 = vmatmul.f32.gmra.mxu0 %v353
      %v417 = vpop.f32.mrf.mxu0
      %v418 = vadd.f32 %v308, %v417
      %419 = vmatmul.f32.gmra.mxu0 %v356
      %v420 = vpop.f32.mrf.mxu0
      %v421 = vadd.f32 %v308, %v420
      %422 = vdwg.mxu0
      %v423 = vmax.f32 %v376, 0.0
      %v424 = vmax.f32 %v379, 0.0
      %v425 = vmax.f32 %v382, 0.0
      %v426 = vmax.f32 %v385, 0.0
      %v427 = vmax.f32 %v388, 0.0
      %v428 = vmax.f32 %v391, 0.0
      %v429 = vmax.f32 %v394, 0.0
      %v430 = vmax.f32 %v397, 0.0
      %v431 = vmax.f32 %v400, 0.0
      %v432 = vmax.f32 %v403, 0.0
      %v433 = vmax.f32 %v406, 0.0
      %v434 = vmax.f32 %v409, 0.0
      %v435 = vmax.f32 %v412, 0.0
      %v436 = vmax.f32 %v415, 0.0
      %v437 = vmax.f32 %v418, 0.0
      %v438 = vmax.f32 %v421, 0.0
      %v439 = vperm.slane %v176, 2
      %v441 = vsel %vm309, %v423, 0
      %v444 = vsel %vm309, %v424, 0
      %v447 = vsel %vm309, %v425, 0
      %v450 = vsel %vm309, %v426, 0
      %v453 = vsel %vm309, %v427, 0
      %v456 = vsel %vm309, %v428, 0
      %v459 = vsel %vm309, %v429, 0
      %v462 = vsel %vm309, %v430, 0
      %v465 = vsel %vm309, %v431, 0
      %v468 = vsel %vm309, %v432, 0
      %v471 = vsel %vm309, %v433, 0
      %v474 = vsel %vm309, %v434, 0
      %v477 = vsel %vm309, %v435, 0
      %v480 = vsel %vm309, %v436, 0
      %v483 = vsel %vm309, %v437, 0
      %v486 = vsel %vm309, %v438, 0
      %488 = vmatpush.msra.mxu0 0.0
      %489 = vmatpush.msra.mxu0 0.0
      %490 = vmatpush.msra.mxu0 0.0
      %491 = vmatpush.msra.mxu0 0.0
      %492 = vmatpush.msra.mxu0 0.0
      %493 = vmatpush.msra.mxu0 0.0
      %494 = vmatpush.msra.mxu0 0.0
      %495 = vmatpush.msra.mxu0 0.0
      %496 = vmatpush.msra.mxu0 0.0
      %497 = vmatpush.msra.mxu0 0.0
      %498 = vmatpush.msra.mxu0 0.0
      %499 = vmatpush.msra.mxu0 0.0
      %500 = vmatpush.msra.mxu0 %v171
      %501 = vmatpush.msra.mxu0 %v170
      %502 = vmatpush.msra.mxu0 %v169
      %503 = vmatpush.msra.mxu0 %v168
      %504 = vmatmul.f32.gmra.mxu0 %v441
      %v505 = vpop.f32.mrf.mxu0
      %v506 = vadd.f32 %v439, %v505
      %507 = vmatmul.f32.gmra.mxu0 %v444
      %v508 = vpop.f32.mrf.mxu0
      %v509 = vadd.f32 %v439, %v508
      %510 = vmatmul.f32.gmra.mxu0 %v447
      %v511 = vpop.f32.mrf.mxu0
      %v512 = vadd.f32 %v439, %v511
      %513 = vmatmul.f32.gmra.mxu0 %v450
      %v514 = vpop.f32.mrf.mxu0
      %v515 = vadd.f32 %v439, %v514
      %516 = vmatmul.f32.gmra.mxu0 %v453
      %v517 = vpop.f32.mrf.mxu0
      %v518 = vadd.f32 %v439, %v517
      %519 = vmatmul.f32.gmra.mxu0 %v456
      %v520 = vpop.f32.mrf.mxu0
      %v521 = vadd.f32 %v439, %v520
      %522 = vmatmul.f32.gmra.mxu0 %v459
      %v523 = vpop.f32.mrf.mxu0
      %v524 = vadd.f32 %v439, %v523
      %525 = vmatmul.f32.gmra.mxu0 %v462
      %v526 = vpop.f32.mrf.mxu0
      %v527 = vadd.f32 %v439, %v526
      %528 = vmatmul.f32.gmra.mxu0 %v465
      %v529 = vpop.f32.mrf.mxu0
      %v530 = vadd.f32 %v439, %v529
      %531 = vmatmul.f32.gmra.mxu0 %v468
      %v532 = vpop.f32.mrf.mxu0
      %v533 = vadd.f32 %v439, %v532
      %534 = vmatmul.f32.gmra.mxu0 %v471
      %v535 = vpop.f32.mrf.mxu0
      %v536 = vadd.f32 %v439, %v535
      %537 = vmatmul.f32.gmra.mxu0 %v474
      %v538 = vpop.f32.mrf.mxu0
      %v539 = vadd.f32 %v439, %v538
      %540 = vmatmul.f32.gmra.mxu0 %v477
      %v541 = vpop.f32.mrf.mxu0
      %v542 = vadd.f32 %v439, %v541
      %543 = vmatmul.f32.gmra.mxu0 %v480
      %v544 = vpop.f32.mrf.mxu0
      %v545 = vadd.f32 %v439, %v544
      %546 = vmatmul.f32.gmra.mxu0 %v483
      %v547 = vpop.f32.mrf.mxu0
      %v548 = vadd.f32 %v439, %v547
      %549 = vmatmul.f32.gmra.mxu0 %v486
      %v550 = vpop.f32.mrf.mxu0
      %v551 = vadd.f32 %v439, %v550
      %552 = vdwg.mxu0
      %v553 = vmax.f32 %v506, 0.0
      %v554 = vmax.f32 %v509, 0.0
      %v555 = vmax.f32 %v512, 0.0
      %v556 = vmax.f32 %v515, 0.0
      %v557 = vmax.f32 %v518, 0.0
      %v558 = vmax.f32 %v521, 0.0
      %v559 = vmax.f32 %v524, 0.0
      %v560 = vmax.f32 %v527, 0.0
      %v561 = vmax.f32 %v530, 0.0
      %v562 = vmax.f32 %v533, 0.0
      %v563 = vmax.f32 %v536, 0.0
      %v564 = vmax.f32 %v539, 0.0
      %v565 = vmax.f32 %v542, 0.0
      %v566 = vmax.f32 %v545, 0.0
      %v567 = vmax.f32 %v548, 0.0
      %v568 = vmax.f32 %v551, 0.0
      %v569 = vperm.slane %v176, 3
      %v571 = vsel %vm309, %v553, 0
      %v574 = vsel %vm309, %v554, 0
      %v577 = vsel %vm309, %v555, 0
      %v580 = vsel %vm309, %v556, 0
      %v583 = vsel %vm309, %v557, 0
      %v586 = vsel %vm309, %v558, 0
      %v589 = vsel %vm309, %v559, 0
      %v592 = vsel %vm309, %v560, 0
      %v595 = vsel %vm309, %v561, 0
      %v598 = vsel %vm309, %v562, 0
      %v601 = vsel %vm309, %v563, 0
      %v604 = vsel %vm309, %v564, 0
      %v607 = vsel %vm309, %v565, 0
      %v610 = vsel %vm309, %v566, 0
      %v613 = vsel %vm309, %v567, 0
      %v616 = vsel %vm309, %v568, 0
      %618 = vmatpush.msra.mxu0 0.0
      %619 = vmatpush.msra.mxu0 0.0
      %620 = vmatpush.msra.mxu0 0.0
      %621 = vmatpush.msra.mxu0 0.0
      %622 = vmatpush.msra.mxu0 0.0
      %623 = vmatpush.msra.mxu0 0.0
      %624 = vmatpush.msra.mxu0 0.0
      %625 = vmatpush.msra.mxu0 0.0
      %626 = vmatpush.msra.mxu0 0.0
      %627 = vmatpush.msra.mxu0 0.0
      %628 = vmatpush.msra.mxu0 0.0
      %629 = vmatpush.msra.mxu0 0.0
      %630 = vmatpush.msra.mxu0 %v175
      %631 = vmatpush.msra.mxu0 %v174
      %632 = vmatpush.msra.mxu0 %v173
      %633 = vmatpush.msra.mxu0 %v172
      %634 = vmatmul.f32.gmra.mxu0 %v571
      %v635 = vpop.f32.mrf.mxu0
      %v636 = vadd.f32 %v569, %v635
      %637 = vmatmul.f32.gmra.mxu0 %v574
      %v638 = vpop.f32.mrf.mxu0
      %v639 = vadd.f32 %v569, %v638
      %640 = vmatmul.f32.gmra.mxu0 %v577
      %v641 = vpop.f32.mrf.mxu0
      %v642 = vadd.f32 %v569, %v641
      %643 = vmatmul.f32.gmra.mxu0 %v580
      %v644 = vpop.f32.mrf.mxu0
      %v645 = vadd.f32 %v569, %v644
      %646 = vmatmul.f32.gmra.mxu0 %v583
      %v647 = vpop.f32.mrf.mxu0
      %v648 = vadd.f32 %v569, %v647
      %649 = vmatmul.f32.gmra.mxu0 %v586
      %v650 = vpop.f32.mrf.mxu0
      %v651 = vadd.f32 %v569, %v650
      %652 = vmatmul.f32.gmra.mxu0 %v589
      %v653 = vpop.f32.mrf.mxu0
      %v654 = vadd.f32 %v569, %v653
      %655 = vmatmul.f32.gmra.mxu0 %v592
      %v656 = vpop.f32.mrf.mxu0
      %v657 = vadd.f32 %v569, %v656
      %658 = vmatmul.f32.gmra.mxu0 %v595
      %v659 = vpop.f32.mrf.mxu0
      %v660 = vadd.f32 %v569, %v659
      %661 = vmatmul.f32.gmra.mxu0 %v598
      %v662 = vpop.f32.mrf.mxu0
      %v663 = vadd.f32 %v569, %v662
      %664 = vmatmul.f32.gmra.mxu0 %v601
      %v665 = vpop.f32.mrf.mxu0
      %v666 = vadd.f32 %v569, %v665
      %667 = vmatmul.f32.gmra.mxu0 %v604
      %v668 = vpop.f32.mrf.mxu0
      %v669 = vadd.f32 %v569, %v668
      %670 = vmatmul.f32.gmra.mxu0 %v607
      %v671 = vpop.f32.mrf.mxu0
      %v672 = vadd.f32 %v569, %v671
      %673 = vmatmul.f32.gmra.mxu0 %v610
      %v674 = vpop.f32.mrf.mxu0
      %v675 = vadd.f32 %v569, %v674
      %676 = vmatmul.f32.gmra.mxu0 %v613
      %v677 = vpop.f32.mrf.mxu0
      %v678 = vadd.f32 %v569, %v677
      %679 = vmatmul.f32.gmra.mxu0 %v616
      %v680 = vpop.f32.mrf.mxu0
      %v681 = vadd.f32 %v569, %v680
      %682 = vdwg.mxu0
      %683 = vst.msk [vmem:[%s145] sm:$0xff] %vm178, %v636
      %684 = vst.msk [vmem:[%s145 + $0x8] sm:$0xff] %vm178, %v639
      %685 = vst.msk [vmem:[%s145 + $0x10] sm:$0xff] %vm178, %v642
      %686 = vst.msk [vmem:[%s145 + $0x18] sm:$0xff] %vm178, %v645
      %687 = vst.msk [vmem:[%s145 + $0x20] sm:$0xff] %vm178, %v648
      %688 = vst.msk [vmem:[%s145 + $0x28] sm:$0xff] %vm178, %v651
      %689 = vst.msk [vmem:[%s145 + $0x30] sm:$0xff] %vm178, %v654
      %690 = vst.msk [vmem:[%s145 + $0x38] sm:$0xff] %vm178, %v657
      %691 = vst.msk [vmem:[%s145 + $0x40] sm:$0xff] %vm178, %v660
      %692 = vst.msk [vmem:[%s145 + $0x48] sm:$0xff] %vm178, %v663
      %693 = vst.msk [vmem:[%s145 + $0x50] sm:$0xff] %vm178, %v666
      %694 = vst.msk [vmem:[%s145 + $0x58] sm:$0xff] %vm178, %v669
      %695 = vst.msk [vmem:[%s145 + $0x60] sm:$0xff] %vm178, %v672
      %696 = vst.msk [vmem:[%s145 + $0x68] sm:$0xff] %vm178, %v675
      %697 = vst.msk [vmem:[%s145 + $0x70] sm:$0xff] %vm178, %v678
      %698 = vst.msk [vmem:[%s145 + $0x78] sm:$0xff] %vm178, %v681
      %s699 = smul.u32 16, %s13
      %p700 = scmp.lt.s32.totalorder %s699, 31
      %s701 = scalar_select %p700, %s699, 31
      %s702 = smul.addr %s701, 8
      %s703 = scalar_lea.vmem %s2, %s702
      // Predicated region
      $region29: #{tpu_custom_call.1} parent=27 // pred_check
        %p704 = pneg %p78
      $region30: #{tpu_custom_call.1} parent=27 // pred_check_branch
        %706 = sbr.rel (%p704) target = $region32
      $region31: #{tpu_custom_call.1} parent=27 // pred_region
        %s707 = smul.u32 16, %s13
      $region32: #{tpu_custom_call.1} parent=27 // pred_fallthru
        _
    $region28: #{tpu_custom_call.1} parent=5 // pred_fallthru
      _
    %p708 = scmp.le.s32.totalorder 2, %s8
    // Predicated region
    $region33: #{tpu_custom_call.1} parent=5 // pred_check
      %p709 = pneg %p708
    $region34: #{tpu_custom_call.1} parent=5 // pred_check_branch
      %711 = sbr.rel (%p709) target = $region36
    $region35: #{tpu_custom_call.1} parent=5 // pred_region
      %s712 = ssub.s32 %s8, 2
      // Predicated region
      $region37: #{tpu_custom_call.1} parent=35 // pred_check
        %p713 = pneg %p84
      $region38: #{tpu_custom_call.1} parent=35 // pred_check_branch
        %715 = sbr.rel (%p713) target = $region40
      $region39: #{tpu_custom_call.1} parent=35 // pred_region
        %s716 = smul.u32 16, %s14
        %p717 = scmp.lt.s32.totalorder %s716, 31
        %s718 = scalar_select %p717, %s716, 31
        %s719 = smul.addr %s718, 8
        %s720 = scalar_lea.vmem %s2, %s719
      $region40: #{tpu_custom_call.1} parent=35 // pred_fallthru
        _
    $region36: #{tpu_custom_call.1} parent=5 // pred_fallthru
      _
  $region6: #{tpu_custom_call.1} parent=0 // loop_footer
    %s12 = sadd.s32 1, %s8
  $region7: #{tpu_custom_call.1} parent=0 // loop_footer_branch
    %7 = sbr.rel target = $region3
  $region8: #{tpu_custom_call.1} parent=0 // loop_exit
    _

</llo_original>
